<compile_context>
chip_gen: v7x
topology: tpu7x:2x2x1
jax: 0.10.0
libtpu: 0.0.40
codegen_flags: <defaults>
</compile_context>

<pallas_src>
import functools
import math

import jax
import jax.numpy as jnp
from jax import lax
from jax.experimental import pallas as pl
from jax.experimental.pallas import tpu as pltpu


# ---------------------------------------------------------------------------
# helpers
# ---------------------------------------------------------------------------

def _round_up(x, m):
    return (x + m - 1) // m * m


def _pick_tile(n, candidates=(512, 256, 128)):
    """Largest candidate tile that divides n; otherwise the full extent."""
    for c in candidates:
        if n >= c and n % c == 0:
            return c
    return n


def _rotate_half(x):
    """cat((-x2, x1)) over the last dim — matches the PyTorch rotate_half."""
    half = x.shape[-1] // 2
    return jnp.concatenate([-x[..., half:], x[..., :half]], axis=-1)


# ---------------------------------------------------------------------------
# tiled linear:  out = x @ W + b     (bf16 operands, f32 accumulation)
# ---------------------------------------------------------------------------

def _linear_kernel(x_ref, w_ref, b_ref, o_ref):
    acc = jnp.dot(x_ref[...], w_ref[...], preferred_element_type=jnp.float32)
    o_ref[...] = (acc + b_ref[...]).astype(o_ref.dtype)


def linear(x2d, w, b, *, tm=None, tn=None):
    """x2d: (T, K); w: (K, N) in (in, out) layout; b: (N,). Returns (T, N) f32.

    Grid is (token tiles, out-feature tiles); K (the reduction dim) is kept whole
    per tile, so the bias is added exactly once and no accumulator is needed.
    Weights stream through VMEM as (K, tn) slices; x tiles stay resident across
    the out-feature axis.
    """
    T, K = x2d.shape
    N = w.shape[1]

    # Token tile: aim for MXU-sized tiles; pad T up instead of requiring T % tm == 0.
    if tm is None:
        if T >= 256:
            tm = 256
        elif T >= 128:
            tm = 128
        else:
            tm = _round_up(T, 8)
    Tp = _round_up(T, tm)

    if tn is None:
        tn = _pick_tile(N)

    x_p = x2d if Tp == T else jnp.pad(x2d, ((0, Tp - T), (0, 0)))
    x_b = x_p.astype(jnp.bfloat16)          # bf16 MXU operands
    w_b = w.astype(jnp.bfloat16)
    b2 = b.reshape(1, N).astype(jnp.float32)  # bias stays f32

    out = pl.pallas_call(
        _linear_kernel,
        out_shape=jax.ShapeDtypeStruct((Tp, N), jnp.float32),
        grid_spec=pltpu.PrefetchScalarGridSpec(
            num_scalar_prefetch=0,
            grid=(Tp // tm, N // tn),
            in_specs=[
                pl.BlockSpec((tm, K), lambda i, j: (i, 0)),   # x tile (resident over j)
                pl.BlockSpec((K, tn), lambda i, j: (0, j)),   # weight slice (streamed)
                pl.BlockSpec((1, tn), lambda i, j: (0, j)),   # bias slice
            ],
            out_specs=pl.BlockSpec((tm, tn), lambda i, j: (i, j)),
        ),
        compiler_params=pltpu.CompilerParams(
            dimension_semantics=("parallel", "parallel"),
            vmem_limit_bytes=48 * 1024 * 1024,
        ),
    )(x_b, w_b, b2)

    return out if Tp == T else out[:T]


# ---------------------------------------------------------------------------
# fused RoPE + causal flash attention
# ---------------------------------------------------------------------------

def _flash_attn_kernel(q_ref, qr_ref, k_ref, kr_ref, v_ref, cos_ref, sin_ref,
                       o_ref, m_sc, l_sc, acc_sc, *, sm_scale, tq, tkv):
    qi = pl.program_id(1)
    ki = pl.program_id(2)

    @pl.when(ki == 0)
    def _init():
        m_sc[...] = jnp.full(m_sc.shape, -1e30, m_sc.dtype)
        l_sc[...] = jnp.zeros(l_sc.shape, l_sc.dtype)
        acc_sc[...] = jnp.zeros(acc_sc.shape, acc_sc.dtype)

    # Skip kv tiles that lie entirely in the causal future of this q tile.
    @pl.when(ki * tkv < (qi + 1) * tq)
    def _update():
        q_start = pl.multiple_of(qi * tq, tq)
        k_start = pl.multiple_of(ki * tkv, tkv)
        cos_q = cos_ref[pl.ds(q_start, tq), :]
        sin_q = sin_ref[pl.ds(q_start, tq), :]
        cos_k = cos_ref[pl.ds(k_start, tkv), :]
        sin_k = sin_ref[pl.ds(k_start, tkv), :]

        # RoPE: x*cos + rotate_half(x)*sin  (rotate_half supplied pre-swapped)
        q_r = q_ref[0].astype(jnp.float32) * cos_q + qr_ref[0].astype(jnp.float32) * sin_q
        k_r = k_ref[0].astype(jnp.float32) * cos_k + kr_ref[0].astype(jnp.float32) * sin_k

        # scores (bf16 MXU operands, f32 accumulation)
        s = lax.dot_general(
            q_r.astype(jnp.bfloat16), k_r.astype(jnp.bfloat16),
            dimension_numbers=(((1,), (1,)), ((), ())),
            preferred_element_type=jnp.float32) * sm_scale

        # causal mask within the tile
        q_pos = qi * tq + lax.broadcasted_iota(jnp.int32, (tq, tkv), 0)
        k_pos = ki * tkv + lax.broadcasted_iota(jnp.int32, (tq, tkv), 1)
        s = jnp.where(q_pos >= k_pos, s, -1e30)

        # online softmax update
        m_prev = m_sc[0]
        m_new = jnp.maximum(m_prev, s.max(axis=-1, keepdims=True))
        alpha = jnp.exp(m_prev - m_new)
        p = jnp.exp(s - m_new)
        l_sc[0] = alpha * l_sc[0] + p.sum(axis=-1, keepdims=True)
        acc_sc[0] = alpha * acc_sc[0] + jnp.dot(
            p.astype(jnp.bfloat16), v_ref[0], preferred_element_type=jnp.float32)
        m_sc[0] = m_new

    @pl.when(ki == pl.num_programs(2) - 1)
    def _finalize():
        o_ref[0] = (acc_sc[0] / l_sc[0]).astype(o_ref.dtype)


def flash_attention_rope(q, k, v, cos, sin, *, sm_scale, tq=None, tkv=None):
    """q, k, v: (B*NH, S, D) ; cos, sin: (S, D). Causal attention with fused RoPE."""
    BH, S, D = q.shape
    if tq is None:
        tq = _pick_tile(S, (256, 128))
    if tkv is None:
        tkv = _pick_tile(S, (256, 128))
    assert S % tq == 0 and S % tkv == 0, "seq len must be divisible by the tiles"

    q_rh = _rotate_half(q)
    k_rh = _rotate_half(k)

    q_b, qr_b = q.astype(jnp.bfloat16), q_rh.astype(jnp.bfloat16)
    k_b, kr_b = k.astype(jnp.bfloat16), k_rh.astype(jnp.bfloat16)
    v_b = v.astype(jnp.bfloat16)
    cos = cos.astype(jnp.float32)
    sin = sin.astype(jnp.float32)

    kernel = functools.partial(_flash_attn_kernel, sm_scale=sm_scale, tq=tq, tkv=tkv)

    return pl.pallas_call(
        kernel,
        out_shape=jax.ShapeDtypeStruct((BH, S, D), jnp.float32),
        grid_spec=pltpu.PrefetchScalarGridSpec(
            num_scalar_prefetch=0,
            grid=(BH, S // tq, S // tkv),
            in_specs=[
                pl.BlockSpec((1, tq, D), lambda b, qi, ki: (b, qi, 0)),   # q
                pl.BlockSpec((1, tq, D), lambda b, qi, ki: (b, qi, 0)),   # rotate_half(q)
                pl.BlockSpec((1, tkv, D), lambda b, qi, ki: (b, ki, 0)),  # k
                pl.BlockSpec((1, tkv, D), lambda b, qi, ki: (b, ki, 0)),  # rotate_half(k)
                pl.BlockSpec((1, tkv, D), lambda b, qi, ki: (b, ki, 0)),  # v
                pl.BlockSpec((S, D), lambda b, qi, ki: (0, 0)),           # cos table
                pl.BlockSpec((S, D), lambda b, qi, ki: (0, 0)),           # sin table
            ],
            out_specs=pl.BlockSpec((1, tq, D), lambda b, qi, ki: (b, qi, 0)),
            scratch_shapes=[
                pltpu.VMEM((1, tq, 1), jnp.float32),   # running max
                pltpu.VMEM((1, tq, 1), jnp.float32),   # running denom
                pltpu.VMEM((1, tq, D), jnp.float32),   # output accumulator
            ],
        ),
        compiler_params=pltpu.CompilerParams(
            dimension_semantics=("parallel", "parallel", "arbitrary"),
            vmem_limit_bytes=48 * 1024 * 1024,
        ),
    )(q_b, qr_b, k_b, kr_b, v_b, cos, sin)


# ---------------------------------------------------------------------------
# full PhiMiniAttention forward
# ---------------------------------------------------------------------------

def phi_mini_attention(x, wqkv, bqkv, wo, bo, *, num_heads, rope_theta=10000.0,
                       tq=None, tkv=None):
    """x: (B, S, H). wqkv: (H, 3H) (in, out) layout, bqkv: (3H,). wo: (H, H), bo: (H,).

    MHA only (num_key_value_heads == num_heads, as the module's qkv_proj implies).
    """
    B, S, H = x.shape
    D = H // num_heads
    assert num_heads * D == H
    T = B * S

    # --- QKV projection (Pallas tiled linear) ---
    qkv = linear(x.reshape(T, H), wqkv, bqkv)            # (T, 3H) f32
    qkv = qkv.reshape(B, S, 3 * H)
    q, k, v = qkv[..., :H], qkv[..., H:2 * H], qkv[..., 2 * H:]

    def to_heads(t):   # (B, S, H) -> (B*NH, S, D)
        return (t.reshape(B, S, num_heads, D)
                 .transpose(0, 2, 1, 3)
                 .reshape(B * num_heads, S, D))

    q, k, v = to_heads(q), to_heads(k), to_heads(v)

    # --- RoPE tables (position_ids = arange(S); no KV cache) ---
    inv_freq = 1.0 / (rope_theta ** (jnp.arange(0, D, 2, dtype=jnp.float32) / D))
    pos = jnp.arange(S, dtype=jnp.float32)
    freqs = jnp.einsum("i,j->ij", pos, inv_freq)
    emb = jnp.concatenate([freqs, freqs], axis=-1)       # (S, D)
    cos, sin = jnp.cos(emb), jnp.sin(emb)

    # --- fused RoPE + causal flash attention (Pallas) ---
    sm_scale = 1.0 / math.sqrt(D)
    attn = flash_attention_rope(q, k, v, cos, sin, sm_scale=sm_scale, tq=tq, tkv=tkv)

    # --- merge heads + output projection (Pallas tiled linear) ---
    attn = (attn.reshape(B, num_heads, S, D)
                .transpose(0, 2, 1, 3)
                .reshape(T, H))
    out = linear(attn, wo, bo)                           # (T, H) f32
    return out.reshape(B, S, H)


# ---------------------------------------------------------------------------
# pure-JAX reference (same math as the PyTorch module's default path)
# ---------------------------------------------------------------------------

def _reference_attention(x, wqkv, bqkv, wo, bo, *, num_heads, rope_theta=10000.0):
    B, S, H = x.shape
    D = H // num_heads

    qkv = x @ wqkv + bqkv
    q, k, v = qkv[..., :H], qkv[..., H:2 * H], qkv[..., 2 * H:]

    def to_heads(t):
        return t.reshape(B, S, num_heads, D).transpose(0, 2, 1, 3)

    q, k, v = to_heads(q), to_heads(k), to_heads(v)

    inv_freq = 1.0 / (rope_theta ** (jnp.arange(0, D, 2, dtype=jnp.float32) / D))
    pos = jnp.arange(S, dtype=jnp.float32)
    freqs = jnp.einsum("i,j->ij", pos, inv_freq)
    emb = jnp.concatenate([freqs, freqs], axis=-1)
    cos = jnp.cos(emb)[None, None]
    sin = jnp.sin(emb)[None, None]

    q = q * cos + _rotate_half(q) * sin
    k = k * cos + _rotate_half(k) * sin

    s = jnp.einsum("bhqd,bhkd->bhqk", q, k) / math.sqrt(D)
    mask = jnp.tril(jnp.ones((S, S), dtype=bool))
    s = jnp.where(mask[None, None], s, -jnp.inf)
    p = jax.nn.softmax(s, axis=-1)
    o = jnp.einsum("bhqk,bhkd->bhqd", p, v)
    o = o.transpose(0, 2, 1, 3).reshape(B, S, H)
    return o @ wo + bo


if __name__ == "__main__":
    # Small shapes consistent with the module: batch=2, seq=16, hidden=256, 4 heads.
    B, S, H, NH = 2, 16, 256, 4          # head_dim = 64
    D = H // NH

    key = jax.random.PRNGKey(0)
    kx, kw1, kb1, kw2, kb2 = jax.random.split(key, 5)

    x = jax.random.normal(kx, (B, S, H), dtype=jnp.float32)

    # Deterministic synthetic parameters; PyTorch stores Linear weight as (out, in) —
    # here we keep (in, out) so the kernels compute x @ W directly.
    scale = 1.0 / math.sqrt(H)
    wqkv = jax.random.uniform(kw1, (H, 3 * H), jnp.float32, -scale, scale)
    bqkv = jax.random.uniform(kb1, (3 * H,), jnp.float32, -scale, scale)
    wo = jax.random.uniform(kw2, (H, H), jnp.float32, -scale, scale)
    bo = jax.random.uniform(kb2, (H,), jnp.float32, -scale, scale)

    # tq=tkv=8 so the flash loop runs multiple kv tiles and exercises the causal skip.
    out = phi_mini_attention(x, wqkv, bqkv, wo, bo, num_heads=NH,
                             rope_theta=10000.0, tq=8, tkv=8)
    out = jax.block_until_ready(out)

    ref = _reference_attention(x, wqkv, bqkv, wo, bo, num_heads=NH, rope_theta=10000.0)
    assert out.shape == (B, S, H)
    err = float(jnp.max(jnp.abs(out - ref)))
    # bf16 MXU operands with f32 accumulation: allow ~1e-2-level absolute error.
    assert err < 5e-2, f"max abs error {err}"

    print("KERNEL_OK")
</pallas_src>

<mosaic_0001>
module attributes {stable_mosaic.version = 11 : i64} {
  func.func @_linear_kernel(%arg0: i32, %arg1: i32, %arg2: memref<32x256xbf16, #tpu.memory_space<vmem>>, %arg3: memref<256x256xbf16, #tpu.memory_space<vmem>>, %arg4: memref<1x256xf32, #tpu.memory_space<vmem>>, %arg5: memref<32x256xf32, #tpu.memory_space<vmem>>) attributes {dimension_semantics = [#tpu.dimension_semantics<parallel>, #tpu.dimension_semantics<parallel>], iteration_bounds = array<i64: 1, 3>, scalar_prefetch = 0 : i64, scratch_operands = 0 : i64, tpu.core_type = #tpu.core_type<tc>, window_params = [{transform_indices = @transform_0, window_bounds = array<i64: 32, 256>}, {transform_indices = @transform_1, window_bounds = array<i64: 256, 256>}, {transform_indices = @transform_2, window_bounds = array<i64: 1, 256>}, {transform_indices = @transform_3, window_bounds = array<i64: 32, 256>}]} {
    %c0 = arith.constant 0 : index
    %c0_0 = arith.constant 0 : index
    %0 = vector.load %arg2[%c0, %c0_0] : memref<32x256xbf16, #tpu.memory_space<vmem>>, vector<32x256xbf16>
    %c0_1 = arith.constant 0 : index
    %c0_2 = arith.constant 0 : index
    %1 = vector.load %arg3[%c0_1, %c0_2] : memref<256x256xbf16, #tpu.memory_space<vmem>>, vector<256x256xbf16>
    %cst = arith.constant dense<0.000000e+00> : vector<32x256xf32>
    %2 = tpu.matmul %0, %1, %cst {dimension_numbers = #tpu.dot_dimension_numbers<[1], [0], [0], [1], [0, 0, 1, 1], [], []>} : vector<32x256xbf16>, vector<256x256xbf16>, vector<32x256xf32> -> vector<32x256xf32>
    %c0_3 = arith.constant 0 : index
    %c0_4 = arith.constant 0 : index
    %3 = vector.load %arg4[%c0_3, %c0_4] : memref<1x256xf32, #tpu.memory_space<vmem>>, vector<1x256xf32>
    %4 = vector.broadcast %3 : vector<1x256xf32> to vector<32x256xf32>
    %5 = arith.addf %2, %4 : vector<32x256xf32>
    %c0_5 = arith.constant 0 : index
    %c0_6 = arith.constant 0 : index
    %6 = vector.load %arg5[%c0_5, %c0_6] : memref<32x256xf32, #tpu.memory_space<vmem>>, vector<32x256xf32>
    tpu.vector_store %arg5[%c0_5, %c0_6], %5 {strides = array<i32>} : memref<32x256xf32, #tpu.memory_space<vmem>>, vector<32x256xf32>,
    return
  }
  func.func @transform_0(%arg0: i32, %arg1: i32) -> (i32, i32) {
    %c0_i32 = arith.constant 0 : i32
    %c0_i32_0 = arith.constant 0 : i32
    return %arg0, %c0_i32 : i32, i32
  }
  func.func @transform_1(%arg0: i32, %arg1: i32) -> (i32, i32) {
    %c0_i32 = arith.constant 0 : i32
    %c0_i32_0 = arith.constant 0 : i32
    return %c0_i32, %arg1 : i32, i32
  }
  func.func @transform_2(%arg0: i32, %arg1: i32) -> (i32, i32) {
    %c0_i32 = arith.constant 0 : i32
    %c0_i32_0 = arith.constant 0 : i32
    return %c0_i32, %arg1 : i32, i32
  }
  func.func @transform_3(%arg0: i32, %arg1: i32) -> (i32, i32) {
    %c0_i32 = arith.constant 0 : i32
    return %arg0, %arg1 : i32, i32
  }
}

</mosaic_0001>

<llo_original>
// kernel: tpu_custom_call.1
$region0: #{tpu_custom_call.1}
  #allocation0 [shape = 'u32[]', space=smem, size = 0x4, offset = 0x4, fixed_abs, tag = 'smem constant byte address 0x4 - core index']
  #allocation1 [shape = 'u32[144,128]{1,0:T(1,128)}', space=vmem, size = 0x12000, scoped, tag = 'internal scratch']
  %s0 = inlined_call_operand.hbm [shape: bf16[32,256], index: 0, kind: input, shape index: {}]
  %s1 = inlined_call_operand.hbm [shape: bf16[256,768], index: 1, kind: input, shape index: {}]
  %s2 = inlined_call_operand.vmem [shape: f32[1,768], index: 2, kind: input, shape index: {}]
  %s3 = inlined_call_operand.hbm [shape: f32[32,768], index: 3, kind: output, shape index: {}]
  %s4 = sld [smem:[#allocation0]]
  $region53: #{tpu_custom_call.1} parent=0
    _
  %s6 = ssub.s32 1, %s4
  %s7 = scalar_select 0, %s6, %s4
  $region1: #{tpu_custom_call.1} parent=0
    #allocation2 [shape = 'u8[16384]{0}', space=vmem, size = 0x4000, scoped, tag = 'input window, operand 0, single buffered']
    #allocation3 [shape = 's32[2]{0}', space=sflag, size = 0x8, scoped, tag = 'scoped memory for tpu_custom_call.1']
    #allocation4 [shape = 's32[2]{0}', space=sflag, size = 0x8, scoped, tag = 'scoped memory for tpu_custom_call.1']
    #allocation5 [shape = 'u8[262144]{0}', space=vmem, size = 0x40000, scoped, tag = 'input window, operand 1']
    #allocation6 [shape = 's32[2]{0}', space=sflag, size = 0x8, scoped, tag = 'scoped memory for tpu_custom_call.1']
    #allocation7 [shape = 'u8[65536]{0}', space=vmem, size = 0x10000, scoped, tag = 'output window, operand 0']
    %8 = vsyncpa [#allocation3], 0
    %9 = vsyncpa [#allocation6], 0
    %s10 = scalar_lea.sflag [#allocation6], 1
    %11 = vsyncpa %s10, 0
    %12 = vsyncpa [#allocation4], 0
    %s13 = scalar_lea.sflag [#allocation4], 1
    %14 = vsyncpa %s13, 0
    loop: start=0, step=1, limit=5
    $region2: #{tpu_custom_call.1} parent=1 // loop_pre_header
      _
    $region3: #{tpu_custom_call.1} parent=1 // loop_header
      %s16 = sphi 0, %s20
      %p17 = scmp.ge.s32.totalorder %s16, 5
      %s23 = sphi 0, %s35
      %s24 = sphi 0, %s31
      %s25 = sphi 0, %s23
      %s26 = sphi 0, %s24
      %s27 = sphi 0, %s25
      %s28 = sphi 0, %s26
      %s38 = sphi 0, %s40
      %s41 = sphi 0, %s38
      %s42 = sphi 0, %s41
      %s58 = sphi 0, %s42
      %s64 = sphi 0, %s66
      %s67 = sphi 0, %s64
      %s68 = sphi 0, %s67
      %s84 = sphi 0, %s68
      %s90 = sphi 0, %s92
      %s93 = sphi 0, %s90
      %s94 = sphi 0, %s93
      %s110 = sphi 0, %s94
      %s118 = sphi 0, %s120
      %s121 = sphi 0, %s118
      %s122 = sphi 0, %s121
      %s138 = sphi 0, %s122
    $region4: #{tpu_custom_call.1} parent=1 // loop_header_branch
      %19 = sbr.rel (%p17) target = $region8
    $region5: #{tpu_custom_call.1} parent=1 // loop_body
      %s21 = ssub.s32 %s16, 1
      %s22 = ssub.s32 %s16, 2
      %s29 = sadd.s32 1, %s24
      %p30 = scmp.ge.s32.totalorder %s29, 3
      %s31 = scalar_select %p30, 0, %s29
      %s32 = sadd.s32 1, %s23
      %s33 = scalar_select %p30, %s32, %s23
      %p34 = scmp.ge.s32.totalorder %s33, 1
      %s35 = scalar_select %p34, 0, %s33
      %s36 = ssub.s32 %s23, %s35
      %p37 = scmp.eq.s32.totalorder %s36, 0
      %s39 = sadd.s32 %s38, 1
      %s40 = scalar_select %p37, %s38, %s39
      %p43 = pneg %p37
      %p44 = scmp.eq.s32.totalorder %s16, 2
      %p45 = por %p43, %p44
      %p46 = scmp.ne.s32.totalorder %s38, %s41
      %p47 = scmp.eq.s32.totalorder %s16, 0
      %p48 = por %p46, %p47
      %p49 = scmp.ne.s32.totalorder %s38, %s41
      %p50 = scmp.eq.s32.totalorder %s21, 2
      %p51 = por %p49, %p50
      %p52 = scmp.ne.s32.totalorder %s41, %s42
      %p53 = scmp.eq.s32.totalorder %s21, 0
      %p54 = por %p52, %p53
      %p55 = scmp.ne.s32.totalorder %s41, %s42
      %p56 = scmp.eq.s32.totalorder %s22, 2
      %p57 = por %p55, %p56
      %p59 = scmp.ne.s32.totalorder %s42, %s58
      %p60 = scmp.eq.s32.totalorder %s22, 0
      %p61 = por %p59, %p60
      %s62 = ssub.s32 %s24, %s31
      %p63 = scmp.eq.s32.totalorder %s62, 0
      %s65 = sadd.s32 %s64, 1
      %s66 = scalar_select %p63, %s64, %s65
      %p69 = pneg %p63
      %p70 = scmp.eq.s32.totalorder %s16, 2
      %p71 = por %p69, %p70
      %p72 = scmp.ne.s32.totalorder %s64, %s67
      %p73 = scmp.eq.s32.totalorder %s16, 0
      %p74 = por %p72, %p73
      %p75 = scmp.ne.s32.totalorder %s64, %s67
      %p76 = scmp.eq.s32.totalorder %s21, 2
      %p77 = por %p75, %p76
      %p78 = scmp.ne.s32.totalorder %s67, %s68
      %p79 = scmp.eq.s32.totalorder %s21, 0
      %p80 = por %p78, %p79
      %p81 = scmp.ne.s32.totalorder %s67, %s68
      %p82 = scmp.eq.s32.totalorder %s22, 2
      %p83 = por %p81, %p82
      %p85 = scmp.ne.s32.totalorder %s68, %s84
      %p86 = scmp.eq.s32.totalorder %s22, 0
      %p87 = por %p85, %p86
      %s88 = ssub.s32 %s24, %s31
      %p89 = scmp.eq.s32.totalorder %s88, 0
      %s91 = sadd.s32 %s90, 1
      %s92 = scalar_select %p89, %s90, %s91
      %p95 = pneg %p89
      %p96 = scmp.eq.s32.totalorder %s16, 2
      %p97 = por %p95, %p96
      %p98 = scmp.ne.s32.totalorder %s90, %s93
      %p99 = scmp.eq.s32.totalorder %s16, 0
      %p100 = por %p98, %p99
      %p101 = scmp.ne.s32.totalorder %s90, %s93
      %p102 = scmp.eq.s32.totalorder %s21, 2
      %p103 = por %p101, %p102
      %p104 = scmp.ne.s32.totalorder %s93, %s94
      %p105 = scmp.eq.s32.totalorder %s21, 0
      %p106 = por %p104, %p105
      %p107 = scmp.ne.s32.totalorder %s93, %s94
      %p108 = scmp.eq.s32.totalorder %s22, 2
      %p109 = por %p107, %p108
      %p111 = scmp.ne.s32.totalorder %s94, %s110
      %p112 = scmp.eq.s32.totalorder %s22, 0
      %p113 = por %p111, %p112
      %s114 = ssub.s32 %s23, %s35
      %s115 = ssub.s32 %s24, %s31
      %s116 = sor.u32 %s114, %s115
      %p117 = scmp.eq.s32.totalorder %s116, 0
      %s119 = sadd.s32 %s118, 1
      %s120 = scalar_select %p117, %s118, %s119
      %p123 = pneg %p117
      %p124 = scmp.eq.s32.totalorder %s16, 2
      %p125 = por %p123, %p124
      %p126 = scmp.ne.s32.totalorder %s118, %s121
      %p127 = scmp.eq.s32.totalorder %s16, 0
      %p128 = por %p126, %p127
      %p129 = scmp.ne.s32.totalorder %s118, %s121
      %p130 = scmp.eq.s32.totalorder %s21, 2
      %p131 = por %p129, %p130
      %p132 = scmp.ne.s32.totalorder %s121, %s122
      %p133 = scmp.eq.s32.totalorder %s21, 0
      %p134 = por %p132, %p133
      %p135 = scmp.ne.s32.totalorder %s121, %s122
      %p136 = scmp.eq.s32.totalorder %s22, 2
      %p137 = por %p135, %p136
      %p139 = scmp.ne.s32.totalorder %s122, %s138
      %p140 = scmp.eq.s32.totalorder %s22, 0
      %p141 = por %p139, %p140
      %p142 = scmp.le.s32.totalorder 1, %s16
      %p143 = scmp.lt.s32.totalorder %s16, 4
      %p144 = pnand %p142, %p143
      %p145 = pneg %p144
      // Predicated region
      $region9: #{tpu_custom_call.1} parent=5 // pred_check
        _
      $region10: #{tpu_custom_call.1} parent=5 // pred_check_branch
        %147 = sbr.rel (%p144) target = $region12
      $region11: #{tpu_custom_call.1} parent=5 // pred_region
        %s148 = ssub.s32 %s16, 1
        // Predicated region
        $region13: #{tpu_custom_call.1} parent=11 // pred_check
          %p149 = pneg %p54
        $region14: #{tpu_custom_call.1} parent=11 // pred_check_branch
          %151 = sbr.rel (%p149) target = $region16
        $region15: #{tpu_custom_call.1} parent=11 // pred_region
          %s152 = smul.u32 4, %s25
          %s154 = ssub.s32 512, 512
          %155 = vsyncadd [#allocation3], %s154
          %s156 = smul.addr %s152, 2
          %s157 = smul.addr %s156, 64
          %s158 = scalar_lea.hbm %s0, %s157
          %s159 = sshll.u32 [#allocation2], 4
          %s160 = int_to_ptr.vmem [resolvable:$true] %s159
          %165 = dma.hbm_to_vmem [thread:$0]  %s158, 512, %s160, [#allocation3], 128, 128, 8
        $region16: #{tpu_custom_call.1} parent=11 // pred_fallthru
          _
      $region12: #{tpu_custom_call.1} parent=5 // pred_fallthru
        _
      %p166 = scmp.lt.s32.totalorder %s16, 3
      // Predicated region
      $region17: #{tpu_custom_call.1} parent=5 // pred_check
        %p167 = pneg %p166
      $region18: #{tpu_custom_call.1} parent=5 // pred_check_branch
        %169 = sbr.rel (%p167) target = $region20
      $region19: #{tpu_custom_call.1} parent=5 // pred_region
        // Predicated region
        $region21: #{tpu_custom_call.1} parent=19 // pred_check
          %p170 = pneg %p74
        $region22: #{tpu_custom_call.1} parent=19 // pred_check_branch
          %172 = sbr.rel (%p170) target = $region24
        $region23: #{tpu_custom_call.1} parent=19 // pred_region
          %s173 = sand.u32 %s64, 1
          %s174 = scalar_lea.sflag [#allocation6], %s173
          %s175 = sand.u32 %s64, 1
          %s176 = smul.addr %s175, 256
          %s177 = scalar_lea.vmem [#allocation5], %s176
          %s178 = smul.u32 2, %s24
          %s180 = ssub.s32 4096, 4096
          %181 = vsyncadd %s174, %s180
          %s182 = smul.addr %s178, 64
          %s183 = scalar_lea.hbm %s1, %s182
          %s184 = sshll.u32 %s177, 4
          %s185 = int_to_ptr.vmem [resolvable:$true] %s184
          %190 = dma.hbm_to_vmem [thread:$0]  %s183, 4096, %s185, %s174, 384, 128, 8
        $region24: #{tpu_custom_call.1} parent=19 // pred_fallthru
          _
        // Predicated region
        $region25: #{tpu_custom_call.1} parent=19 // pred_check
          %p191 = pneg %p100
        $region26: #{tpu_custom_call.1} parent=19 // pred_check_branch
          %193 = sbr.rel (%p191) target = $region28
        $region27: #{tpu_custom_call.1} parent=19 // pred_region
          %s194 = smul.u32 2, %s24
          %p195 = scmp.lt.s32.totalorder %s194, 5
          %s196 = scalar_select %p195, %s194, 5
          %s197 = scalar_lea.vmem %s2, %s196
          %s198 = smul.u32 2, %s24
        $region28: #{tpu_custom_call.1} parent=19 // pred_fallthru
          _
      $region20: #{tpu_custom_call.1} parent=5 // pred_fallthru
        _
      %p199 = scmp.le.s32.totalorder 1, %s16
      %p200 = scmp.lt.s32.totalorder %s16, 4
      %p201 = pnand %p199, %p200
      %p202 = pneg %p201
      // Predicated region
      $region29: #{tpu_custom_call.1} parent=5 // pred_check
        _
      $region30: #{tpu_custom_call.1} parent=5 // pred_check_branch
        %204 = sbr.rel (%p201) target = $region32
      $region31: #{tpu_custom_call.1} parent=5 // pred_region
        %s205 = ssub.s32 %s16, 1
        // Predicated region
        $region33: #{tpu_custom_call.1} parent=31 // pred_check
          %p206 = pneg %p54
        $region34: #{tpu_custom_call.1} parent=31 // pred_check_branch
          %208 = sbr.rel (%p206) target = $region36
        $region35: #{tpu_custom_call.1} parent=31 // pred_region
          %209 = dma.done [#allocation3], 512
        $region36: #{tpu_custom_call.1} parent=31 // pred_fallthru
          _
        %s210 = sand.u32 %s67, 1
        %s211 = scalar_lea.sflag [#allocation6], %s210
        %s212 = sand.u32 %s67, 1
        %s213 = smul.addr %s212, 256
        %s214 = scalar_lea.vmem [#allocation5], %s213
        // Predicated region
        $region37: #{tpu_custom_call.1} parent=31 // pred_check
          %p215 = pneg %p80
        $region38: #{tpu_custom_call.1} parent=31 // pred_check_branch
          %217 = sbr.rel (%p215) target = $region40
        $region39: #{tpu_custom_call.1} parent=31 // pred_region
          %218 = dma.done %s211, 4096
        $region40: #{tpu_custom_call.1} parent=31 // pred_fallthru
          _
        %p219 = pneg %p54
        %p220 = pneg %p51
        %s221 = sand.u32 %s67, 1
        %s222 = scalar_lea.sflag [#allocation6], %s221
        %s223 = sand.u32 %s67, 1
        %s224 = smul.addr %s223, 256
        %s225 = scalar_lea.vmem [#allocation5], %s224
        %p226 = pneg %p80
        %p227 = pneg %p77
        %s228 = smul.u32 2, %s26
        %p229 = scmp.lt.s32.totalorder %s228, 5
        %s230 = scalar_select %p229, %s228, 5
        %s231 = scalar_lea.vmem %s2, %s230
        %p232 = pneg %p106
        %p233 = pneg %p103
        %p234 = pneg %p134
        %p235 = pneg %p131
        %s236 = sand.u32 %s121, 1
        %s237 = scalar_lea.sflag [#allocation4], %s236
        %s238 = sand.u32 %s121, 1
        %s239 = smul.addr %s238, 64
        %s240 = scalar_lea.vmem [#allocation7], %s239
        %s241 = smul.u32 4, %s25
        %s242 = smul.u32 2, %s26
        %s243 = smul.u32 2, %s26
        %p244 = scmp.lt.s32.totalorder %s243, 5
        %s245 = scalar_select %p244, %s243, 5
        %s246 = scalar_lea.vmem %s2, %s245
        %s247 = smul.u32 2, %s26
        %s248 = smul.u32 4, %s25
        %s249 = smul.u32 2, %s26
        %v250 = vld [vmem:[#allocation2] sm:$0xff]
        %v251 = vld [vmem:[#allocation2 + $0x8] sm:$0xff]
        %v252 = vld [vmem:[#allocation2 + $0x10] sm:$0xff]
        %v253 = vld [vmem:[#allocation2 + $0x18] sm:$0xff]
        %v254 = vld [vmem:[%s214] sm:$0xff]
        %v255 = vld [vmem:[%s214 + $0x8] sm:$0xff]
        %v256 = vld [vmem:[%s214 + $0x10] sm:$0xff]
        %v257 = vld [vmem:[%s214 + $0x18] sm:$0xff]
        %v258 = vld [vmem:[%s214 + $0x20] sm:$0xff]
        %v259 = vld [vmem:[%s214 + $0x28] sm:$0xff]
        %v260 = vld [vmem:[%s214 + $0x30] sm:$0xff]
        %v261 = vld [vmem:[%s214 + $0x38] sm:$0xff]
        %v262 = vld [vmem:[%s214 + $0x40] sm:$0xff]
        %v263 = vld [vmem:[%s214 + $0x48] sm:$0xff]
        %v264 = vld [vmem:[%s214 + $0x50] sm:$0xff]
        %v265 = vld [vmem:[%s214 + $0x58] sm:$0xff]
        %v266 = vld [vmem:[%s214 + $0x60] sm:$0xff]
        %v267 = vld [vmem:[%s214 + $0x68] sm:$0xff]
        %v268 = vld [vmem:[%s214 + $0x70] sm:$0xff]
        %v269 = vld [vmem:[%s214 + $0x78] sm:$0xff]
        %v270 = vld [vmem:[%s214 + $0x80] sm:$0xff]
        %v271 = vld [vmem:[%s214 + $0x88] sm:$0xff]
        %v272 = vld [vmem:[%s214 + $0x90] sm:$0xff]
        %v273 = vld [vmem:[%s214 + $0x98] sm:$0xff]
        %v274 = vld [vmem:[%s214 + $0xa0] sm:$0xff]
        %v275 = vld [vmem:[%s214 + $0xa8] sm:$0xff]
        %v276 = vld [vmem:[%s214 + $0xb0] sm:$0xff]
        %v277 = vld [vmem:[%s214 + $0xb8] sm:$0xff]
        %v278 = vld [vmem:[%s214 + $0xc0] sm:$0xff]
        %v279 = vld [vmem:[%s214 + $0xc8] sm:$0xff]
        %v280 = vld [vmem:[%s214 + $0xd0] sm:$0xff]
        %v281 = vld [vmem:[%s214 + $0xd8] sm:$0xff]
        %v282 = vld [vmem:[%s214 + $0xe0] sm:$0xff]
        %v283 = vld [vmem:[%s214 + $0xe8] sm:$0xff]
        %v284 = vld [vmem:[%s214 + $0xf0] sm:$0xff]
        %v285 = vld [vmem:[%s214 + $0xf8] sm:$0xff]
        %v286 = vld [vmem:[%s246] sm:$0x3]
        %v288 = vlaneseq
        %v289 = vshrl.u32 %v288, 7
        %v290 = vsub.s32 0, %v289
        %v291 = vrot.slane %v286, %v290
        %v292 = vlaneseq
        %v293 = vshrl.u32 %v292, 7
        %v294 = vsub.s32 1, %v293
        %v295 = vrot.slane %v286, %v294
        %v302 = vunpack.c.l.b16 %v250
        %v303 = vunpack.c.h.b16 %v250
        %v304 = vunpack.c.l.b16 %v251
        %v305 = vunpack.c.h.b16 %v251
        %v306 = vunpack.c.l.b16 %v252
        %v307 = vunpack.c.h.b16 %v252
        %v308 = vunpack.c.l.b16 %v253
        %v309 = vunpack.c.h.b16 %v253
        %v310 = vpack.c.b16 %v304, %v302
        %v311 = vpack.c.b16 %v305, %v303
        %v312 = vpack.c.b16 %v308, %v306
        %v313 = vpack.c.b16 %v309, %v307
        %v350 = vunpack.c.l.b16 %v254
        %v351 = vunpack.c.h.b16 %v254
        %v352 = vunpack.c.l.b16 %v255
        %v353 = vunpack.c.h.b16 %v255
        %v354 = vunpack.c.l.b16 %v256
        %v355 = vunpack.c.h.b16 %v256
        %v356 = vunpack.c.l.b16 %v257
        %v357 = vunpack.c.h.b16 %v257
        %v358 = vunpack.c.l.b16 %v258
        %v359 = vunpack.c.h.b16 %v258
        %v360 = vunpack.c.l.b16 %v259
        %v361 = vunpack.c.h.b16 %v259
        %v362 = vunpack.c.l.b16 %v260
        %v363 = vunpack.c.h.b16 %v260
        %v364 = vunpack.c.l.b16 %v261
        %v365 = vunpack.c.h.b16 %v261
        %v366 = vunpack.c.l.b16 %v262
        %v367 = vunpack.c.h.b16 %v262
        %v368 = vunpack.c.l.b16 %v263
        %v369 = vunpack.c.h.b16 %v263
        %v370 = vunpack.c.l.b16 %v264
        %v371 = vunpack.c.h.b16 %v264
        %v372 = vunpack.c.l.b16 %v265
        %v373 = vunpack.c.h.b16 %v265
        %v374 = vunpack.c.l.b16 %v266
        %v375 = vunpack.c.h.b16 %v266
        %v376 = vunpack.c.l.b16 %v267
        %v377 = vunpack.c.h.b16 %v267
        %v378 = vunpack.c.l.b16 %v268
        %v379 = vunpack.c.h.b16 %v268
        %v380 = vunpack.c.l.b16 %v269
        %v381 = vunpack.c.h.b16 %v269
        %v382 = vunpack.c.l.b16 %v270
        %v383 = vunpack.c.h.b16 %v270
        %v384 = vunpack.c.l.b16 %v271
        %v385 = vunpack.c.h.b16 %v271
        %v386 = vunpack.c.l.b16 %v272
        %v387 = vunpack.c.h.b16 %v272
        %v388 = vunpack.c.l.b16 %v273
        %v389 = vunpack.c.h.b16 %v273
        %v390 = vunpack.c.l.b16 %v274
        %v391 = vunpack.c.h.b16 %v274
        %v392 = vunpack.c.l.b16 %v275
        %v393 = vunpack.c.h.b16 %v275
        %v394 = vunpack.c.l.b16 %v276
        %v395 = vunpack.c.h.b16 %v276
        %v396 = vunpack.c.l.b16 %v277
        %v397 = vunpack.c.h.b16 %v277
        %v398 = vunpack.c.l.b16 %v278
        %v399 = vunpack.c.h.b16 %v278
        %v400 = vunpack.c.l.b16 %v279
        %v401 = vunpack.c.h.b16 %v279
        %v402 = vunpack.c.l.b16 %v280
        %v403 = vunpack.c.h.b16 %v280
        %v404 = vunpack.c.l.b16 %v281
        %v405 = vunpack.c.h.b16 %v281
        %v406 = vunpack.c.l.b16 %v282
        %v407 = vunpack.c.h.b16 %v282
        %v408 = vunpack.c.l.b16 %v283
        %v409 = vunpack.c.h.b16 %v283
        %v410 = vunpack.c.l.b16 %v284
        %v411 = vunpack.c.h.b16 %v284
        %v412 = vunpack.c.l.b16 %v285
        %v413 = vunpack.c.h.b16 %v285
        %v414 = vpack.c.b16 %v352, %v350
        %v415 = vpack.c.b16 %v353, %v351
        %v416 = vpack.c.b16 %v356, %v354
        %v417 = vpack.c.b16 %v357, %v355
        %v418 = vpack.c.b16 %v360, %v358
        %v419 = vpack.c.b16 %v361, %v359
        %v420 = vpack.c.b16 %v364, %v362
        %v421 = vpack.c.b16 %v365, %v363
        %v422 = vpack.c.b16 %v368, %v366
        %v423 = vpack.c.b16 %v369, %v367
        %v424 = vpack.c.b16 %v372, %v370
        %v425 = vpack.c.b16 %v373, %v371
        %v426 = vpack.c.b16 %v376, %v374
        %v427 = vpack.c.b16 %v377, %v375
        %v428 = vpack.c.b16 %v380, %v378
        %v429 = vpack.c.b16 %v381, %v379
        %v430 = vpack.c.b16 %v384, %v382
        %v431 = vpack.c.b16 %v385, %v383
        %v432 = vpack.c.b16 %v388, %v386
        %v433 = vpack.c.b16 %v389, %v387
        %v434 = vpack.c.b16 %v392, %v390
        %v435 = vpack.c.b16 %v393, %v391
        %v436 = vpack.c.b16 %v396, %v394
        %v437 = vpack.c.b16 %v397, %v395
        %v438 = vpack.c.b16 %v400, %v398
        %v439 = vpack.c.b16 %v401, %v399
        %v440 = vpack.c.b16 %v404, %v402
        %v441 = vpack.c.b16 %v405, %v403
        %v442 = vpack.c.b16 %v408, %v406
        %v443 = vpack.c.b16 %v409, %v407
        %v444 = vpack.c.b16 %v412, %v410
        %v445 = vpack.c.b16 %v413, %v411
        %478 = vmatprep.subr.bf16.mxu0 %v415
        %479 = vmatpush1.bf16.msra.mxu0 %v414
        %480 = vmatprep.subr.bf16.mxu0 %v417
        %481 = vmatpush1.bf16.msra.mxu0 %v416
        %482 = vmatprep.subr.bf16.mxu0 %v419
        %483 = vmatpush1.bf16.msra.mxu0 %v418
        %484 = vmatprep.subr.bf16.mxu0 %v421
        %485 = vmatpush1.bf16.msra.mxu0 %v420
        %486 = vmatprep.subr.bf16.mxu0 %v423
        %487 = vmatpush1.bf16.msra.mxu0 %v422
        %488 = vmatprep.subr.bf16.mxu0 %v425
        %489 = vmatpush1.bf16.msra.mxu0 %v424
        %490 = vmatprep.subr.bf16.mxu0 %v427
        %491 = vmatpush1.bf16.msra.mxu0 %v426
        %492 = vmatprep.subr.bf16.mxu0 %v429
        %493 = vmatpush1.bf16.msra.mxu0 %v428
        %494 = vmatprep.subr.bf16.mxu0 %v431
        %495 = vmatpush1.bf16.msra.mxu0 %v430
        %496 = vmatprep.subr.bf16.mxu0 %v433
        %497 = vmatpush1.bf16.msra.mxu0 %v432
        %498 = vmatprep.subr.bf16.mxu0 %v435
        %499 = vmatpush1.bf16.msra.mxu0 %v434
        %500 = vmatprep.subr.bf16.mxu0 %v437
        %501 = vmatpush1.bf16.msra.mxu0 %v436
        %502 = vmatprep.subr.bf16.mxu0 %v439
        %503 = vmatpush1.bf16.msra.mxu0 %v438
        %504 = vmatprep.subr.bf16.mxu0 %v441
        %505 = vmatpush1.bf16.msra.mxu0 %v440
        %506 = vmatprep.subr.bf16.mxu0 %v443
        %507 = vmatpush1.bf16.msra.mxu0 %v442
        %508 = vmatprep.subr.bf16.mxu0 %v445
        %509 = vmatpush1.bf16.msra.mxu0 %v444
        %510 = vmatprep.mubr.bf16.mxu0 %v311
        %511 = vmatmul.mubr.bf16.gmra.mrb[0].mxu0 %v310
        %v512 = vpop.f32.mrb[0].mxu0
        %v513 = vadd.f32 %v291, %v512
        %v514 = vpop.f32.mrb[0].mxu0
        %v515 = vadd.f32 %v295, %v514
        %v516 = vpop.f32.mrb[0].mxu0
        %v517 = vadd.f32 %v291, %v516
        %v518 = vpop.f32.mrb[0].mxu0
        %v519 = vadd.f32 %v295, %v518
        %520 = vmatprep.mubr.bf16.mxu0 %v313
        %521 = vmatmul.mubr.bf16.gmra.mrb[0].mxu0 %v312
        %v522 = vpop.f32.mrb[0].mxu0
        %v523 = vadd.f32 %v291, %v522
        %v524 = vpop.f32.mrb[0].mxu0
        %v525 = vadd.f32 %v295, %v524
        %v526 = vpop.f32.mrb[0].mxu0
        %v527 = vadd.f32 %v291, %v526
        %v528 = vpop.f32.mrb[0].mxu0
        %v529 = vadd.f32 %v295, %v528
        %530 = vdwg.mxu0
        %531 = vst [vmem:[%s240] sm:$0xff] %v513
        %532 = vst [vmem:[%s240 + $0x8] sm:$0xff] %v515
        %533 = vst [vmem:[%s240 + $0x10] sm:$0xff] %v517
        %534 = vst [vmem:[%s240 + $0x18] sm:$0xff] %v519
        %535 = vst [vmem:[%s240 + $0x20] sm:$0xff] %v523
        %536 = vst [vmem:[%s240 + $0x28] sm:$0xff] %v525
        %537 = vst [vmem:[%s240 + $0x30] sm:$0xff] %v527
        %538 = vst [vmem:[%s240 + $0x38] sm:$0xff] %v529
        %s539 = sand.u32 %s121, 1
        %s540 = scalar_lea.sflag [#allocation4], %s539
        %s541 = sand.u32 %s121, 1
        %s542 = smul.addr %s541, 64
        %s543 = scalar_lea.vmem [#allocation7], %s542
        // Predicated region
        $region41: #{tpu_custom_call.1} parent=31 // pred_check
          %p544 = pneg %p131
        $region42: #{tpu_custom_call.1} parent=31 // pred_check_branch
          %546 = sbr.rel (%p544) target = $region44
        $region43: #{tpu_custom_call.1} parent=31 // pred_region
          %s547 = smul.u32 4, %s25
          %s548 = smul.u32 2, %s26
          %s550 = ssub.s32 1024, 1024
          %551 = vsyncadd %s540, %s550
          %s552 = smul.addr %s547, 6
          %s553 = sadd.s32 %s548, %s552
          %s554 = smul.addr %s553, 128
          %s555 = scalar_lea.hbm %s3, %s554
          %s556 = sshll.u32 %s543, 4
          %s557 = int_to_ptr.vmem [resolvable:$true] %s556
          %562 = dma.vmem_to_hbm [thread:$0]  %s557, 1024, %s555, %s540, 256, 768, 16
        $region44: #{tpu_custom_call.1} parent=31 // pred_fallthru
          _
      $region32: #{tpu_custom_call.1} parent=5 // pred_fallthru
        _
      %p563 = scmp.le.s32.totalorder 2, %s16
      // Predicated region
      $region45: #{tpu_custom_call.1} parent=5 // pred_check
        %p564 = pneg %p563
      $region46: #{tpu_custom_call.1} parent=5 // pred_check_branch
        %566 = sbr.rel (%p564) target = $region48
      $region47: #{tpu_custom_call.1} parent=5 // pred_region
        %s567 = ssub.s32 %s16, 2
        // Predicated region
        $region49: #{tpu_custom_call.1} parent=47 // pred_check
          %p568 = pneg %p137
        $region50: #{tpu_custom_call.1} parent=47 // pred_check_branch
          %570 = sbr.rel (%p568) target = $region52
        $region51: #{tpu_custom_call.1} parent=47 // pred_region
          %s571 = sand.u32 %s122, 1
          %s572 = scalar_lea.sflag [#allocation4], %s571
          %s573 = sand.u32 %s122, 1
          %s574 = smul.addr %s573, 64
          %s575 = scalar_lea.vmem [#allocation7], %s574
          %576 = dma.done %s572, 1024
        $region52: #{tpu_custom_call.1} parent=47 // pred_fallthru
          _
      $region48: #{tpu_custom_call.1} parent=5 // pred_fallthru
        _
    $region6: #{tpu_custom_call.1} parent=1 // loop_footer
      %s20 = sadd.s32 1, %s16
    $region7: #{tpu_custom_call.1} parent=1 // loop_footer_branch
      %15 = sbr.rel target = $region3
    $region8: #{tpu_custom_call.1} parent=1 // loop_exit
      _
    %577 = vsyncpa [#allocation3], 1
    %s578 = scalar_lea.sflag [#allocation3], 1
    %579 = vsyncpa %s578, 1
    %580 = vsyncpa [#allocation6], 1
    %s581 = scalar_lea.sflag [#allocation6], 1
    %582 = vsyncpa %s581, 1
    %583 = vsyncpa [#allocation4], 1
    %s584 = scalar_lea.sflag [#allocation4], 1
    %585 = vsyncpa %s584, 1

</llo_original>
